<compile_context>
chip_gen: v5e
topology: v5e:2x2
jax: 0.10.0
libtpu: 0.0.40
codegen_flags: <defaults>
</compile_context>

<pallas_src>
import functools

import jax
import jax.numpy as jnp
from jax.experimental import pallas as pl
from jax.experimental.pallas import tpu as pltpu

LANE = 128  # lane padding for the (tiny, VMEM-resident) hidden-layer weights


def _round_up(x, m):
    return ((x + m - 1) // m) * m


def _mlp_kernel(x_ref,
                w1_ref, b1_ref,
                w2_ref, b2_ref,
                w3_ref, b3_ref,
                w4_ref, b4_ref,
                o_ref,
                *, compute_dtype, out_width):
    """Fused 4-layer MLP forward on one (TB, in_dim) batch tile.

    Hidden weights/biases are lane-padded to 128 and VMEM-resident across grid
    steps (constant index_map). x and the output travel at their true widths.

    CORRECTNESS COUPLING (do not break): padded hidden activation lanes hold
    sigmoid(0 + 0) = 0.5; they are harmless ONLY because the NEXT layer's
    padded weight ROWS are exactly zero (see jnp.zeros construction in
    ann_forward). Padding biases / weight rows with anything nonzero, or
    changing the activation, silently corrupts results.
    """

    def dense(h, w_ref, b_ref):
        acc = jnp.dot(h.astype(compute_dtype), w_ref[...],
                      preferred_element_type=jnp.float32)
        return acc + b_ref[...]  # bias stays f32

    def sigmoid(z):
        # sigmoid(z) = 0.5 * (tanh(z/2) + 1): one EUP op, f32 math (v5e-safe).
        return 0.5 * (jnp.tanh(0.5 * z) + 1.0)

    h = sigmoid(dense(x_ref[...], w1_ref, b1_ref))
    h = sigmoid(dense(h, w2_ref, b2_ref))
    h = sigmoid(dense(h, w3_ref, b3_ref))
    z = dense(h, w4_ref, b4_ref)                 # (TB, 128) f32; padded cols are 0
    # In-register slice to the true output width; the HBM writeback carries no
    # padding (a few vst.msk partial stores are far cheaper than padded bytes).
    o_ref[...] = z[:, :out_width].astype(o_ref.dtype)   # no final activation


def _choose_batch_tile(B, batch_tile):
    """Large steps for DMA efficiency, but keep >= 4 grid steps (v7x 2 TCs)."""
    if B < 8:
        return B            # block dim == full array dim: always layout-legal
    tb = min(batch_tile, _round_up(pl.cdiv(B, 4), 8))
    return max(tb, 8)


def ann_forward(x, params, *, compute_dtype=jnp.float32, batch_tile=2048):
    """x: [B, input_dim]. params: list of (W[in,out], b[1,out]) float32.

    compute_dtype: dtype of the MXU matmul operands (float32 or bfloat16).
    bf16 operands are native on v5e/v6e/v7x MXUs; accumulation and sigmoid
    math stay f32, so bf16 is safe on every generation.
    """
    B, in_dim = x.shape
    out_dim = params[-1][0].shape[1]
    out_dtype = jnp.float32

    if B == 0:
        return jnp.zeros((0, out_dim), out_dtype)

    # Single cast of x (only if a narrower matmul dtype was requested): halves
    # the dominant HBM read stream.  No lane padding of x.
    if x.dtype != compute_dtype:
        x = x.astype(compute_dtype)

    TB = _choose_batch_tile(B, batch_tile)
    grid = (pl.cdiv(B, TB),)   # ragged last block: Pallas masks the writeback

    in_specs = [pl.BlockSpec((TB, in_dim), lambda i: (i, 0))]
    flat_params = []
    for li, (w, b) in enumerate(params):
        fi, fo = w.shape
        # K of layer 0 matches the unpadded x width; later layers see the
        # previous layer's lane-padded width.  N is padded to 128 so every
        # matmul is lane-dense; the final result is sliced in-register.
        kp = fi if li == 0 else _round_up(fi, LANE)
        np_ = _round_up(fo, LANE)
        # Zero padding is load-bearing: padded weight ROWS must stay zero so
        # the previous layer's padded activation lanes (sigmoid(0)=0.5) cancel.
        wp = jnp.zeros((kp, np_), compute_dtype).at[:fi, :fo].set(
            w.astype(compute_dtype))
        bp = jnp.zeros((1, np_), jnp.float32).at[:, :fo].set(b.reshape(1, fo))
        flat_params += [wp, bp]
        # Constant index_map -> fetched once, VMEM-resident across grid steps.
        in_specs += [pl.BlockSpec(wp.shape, lambda i: (0, 0)),
                     pl.BlockSpec(bp.shape, lambda i: (0, 0))]

    # Advisory cost hint so XLA can schedule around the custom call.
    kdims = [in_dim] + [fp.shape[1] for fp in flat_params[0::2]]
    flops = 2 * B * sum(a * b for a, b in zip(kdims[:-1], kdims[1:]))
    transcendentals = B * sum(kdims[1:-1])
    bytes_accessed = (x.size * x.dtype.itemsize
                      + sum(a.size * a.dtype.itemsize for a in flat_params)
                      + B * out_dim * jnp.dtype(out_dtype).itemsize)
    cost = pl.CostEstimate(flops=flops, transcendentals=transcendentals,
                           bytes_accessed=bytes_accessed)

    return pl.pallas_call(
        functools.partial(_mlp_kernel, compute_dtype=compute_dtype,
                          out_width=out_dim),
        out_shape=jax.ShapeDtypeStruct((B, out_dim), out_dtype),
        grid_spec=pltpu.PrefetchScalarGridSpec(
            num_scalar_prefetch=0,
            grid=grid,                           # pipeline over batch tiles
            in_specs=in_specs,
            out_specs=pl.BlockSpec((TB, out_dim), lambda i: (i, 0)),
        ),
        compiler_params=pltpu.CompilerParams(
            dimension_semantics=("parallel",)),  # batch tiles across TCs (v7x)
        cost_estimate=cost,
    )(x, *flat_params)


def init_params(key, input_dim, output_dim, scale=5.0):
    """Replicates xavier_normal_ * scale on weights, zeros on biases."""
    dims = [(input_dim, 5), (5, 10), (10, 5), (5, output_dim)]
    params = []
    for (fan_in, fan_out) in dims:
        key, sub = jax.random.split(key)
        std = (2.0 / (fan_in + fan_out)) ** 0.5
        w = jax.random.normal(sub, (fan_in, fan_out), dtype=jnp.float32) * std * scale
        b = jnp.zeros((1, fan_out), dtype=jnp.float32)
        params.append((w, b))
    return params


def ann_reference(x, params, compute_dtype=jnp.float32):
    """Pure-JAX reference of the same forward pass (for sanity check)."""
    h = x
    for i, (w, b) in enumerate(params):
        z = jnp.dot(h.astype(compute_dtype), w.astype(compute_dtype),
                    preferred_element_type=jnp.float32) + b.reshape(1, -1)
        h = jax.nn.sigmoid(z) if i < len(params) - 1 else z
    return h


if __name__ == "__main__":
    key = jax.random.PRNGKey(0)
    k_x, k_p = jax.random.split(key)

    batch, input_dim, output_dim = 8, 16, 3
    x = jax.random.normal(k_x, (batch, input_dim), dtype=jnp.float32)
    params = init_params(k_p, input_dim, output_dim)

    # f32 path: exact-ish check against the pure-JAX reference.
    out = jax.block_until_ready(ann_forward(x, params))
    ref = ann_reference(x, params)
    assert out.shape == (batch, output_dim)
    assert jnp.allclose(out, ref, atol=1e-4, rtol=1e-4), "f32 mismatch vs reference"

    # bf16 matmul-operand path (recommended on v5e/v6e/v7x): f32 accumulation,
    # f32 sigmoid math; compared against a reference doing the same casts.
    out_bf16 = jax.block_until_ready(
        ann_forward(x, params, compute_dtype=jnp.bfloat16))
    ref_bf16 = ann_reference(x, params, compute_dtype=jnp.bfloat16)
    assert out_bf16.shape == (batch, output_dim)
    assert jnp.allclose(out_bf16, ref_bf16, atol=1e-2, rtol=1e-2), \
        "bf16 mismatch vs reference"

    print("KERNEL_OK")
</pallas_src>

<mosaic_0001>
module attributes {stable_mosaic.version = 11 : i64} {
  func.func @_mlp_kernel(%arg0: i32, %arg1: memref<8x16xf32, #tpu.memory_space<vmem>>, %arg2: memref<16x128xf32, #tpu.memory_space<vmem>>, %arg3: memref<1x128xf32, #tpu.memory_space<vmem>>, %arg4: memref<128x128xf32, #tpu.memory_space<vmem>>, %arg5: memref<1x128xf32, #tpu.memory_space<vmem>>, %arg6: memref<128x128xf32, #tpu.memory_space<vmem>>, %arg7: memref<1x128xf32, #tpu.memory_space<vmem>>, %arg8: memref<128x128xf32, #tpu.memory_space<vmem>>, %arg9: memref<1x128xf32, #tpu.memory_space<vmem>>, %arg10: memref<8x3xf32, #tpu.memory_space<vmem>>) attributes {dimension_semantics = [#tpu.dimension_semantics<parallel>], iteration_bounds = array<i64: 1>, scalar_prefetch = 0 : i64, scratch_operands = 0 : i64, tpu.core_type = #tpu.core_type<tc>, window_params = [{transform_indices = @transform_0, window_bounds = array<i64: 8, 16>}, {pipeline_mode = #tpu.pipeline_mode<synchronous>, transform_indices = @transform_1, window_bounds = array<i64: 16, 128>}, {pipeline_mode = #tpu.pipeline_mode<synchronous>, transform_indices = @transform_2, window_bounds = array<i64: 1, 128>}, {pipeline_mode = #tpu.pipeline_mode<synchronous>, transform_indices = @transform_3, window_bounds = array<i64: 128, 128>}, {pipeline_mode = #tpu.pipeline_mode<synchronous>, transform_indices = @transform_4, window_bounds = array<i64: 1, 128>}, {pipeline_mode = #tpu.pipeline_mode<synchronous>, transform_indices = @transform_5, window_bounds = array<i64: 128, 128>}, {pipeline_mode = #tpu.pipeline_mode<synchronous>, transform_indices = @transform_6, window_bounds = array<i64: 1, 128>}, {pipeline_mode = #tpu.pipeline_mode<synchronous>, transform_indices = @transform_7, window_bounds = array<i64: 128, 128>}, {pipeline_mode = #tpu.pipeline_mode<synchronous>, transform_indices = @transform_8, window_bounds = array<i64: 1, 128>}, {transform_indices = @transform_9, window_bounds = array<i64: 8, 3>}]} {
    %c0 = arith.constant 0 : index
    %c0_0 = arith.constant 0 : index
    %0 = vector.load %arg1[%c0, %c0_0] : memref<8x16xf32, #tpu.memory_space<vmem>>, vector<8x16xf32>
    %c0_1 = arith.constant 0 : index
    %c0_2 = arith.constant 0 : index
    %1 = vector.load %arg2[%c0_1, %c0_2] : memref<16x128xf32, #tpu.memory_space<vmem>>, vector<16x128xf32>
    %cst = arith.constant dense<0.000000e+00> : vector<8x128xf32>
    %2 = tpu.matmul %0, %1, %cst {dimension_numbers = #tpu.dot_dimension_numbers<[1], [0], [0], [1], [0, 0, 1, 1], [], []>} : vector<8x16xf32>, vector<16x128xf32>, vector<8x128xf32> -> vector<8x128xf32>
    %c0_3 = arith.constant 0 : index
    %c0_4 = arith.constant 0 : index
    %3 = vector.load %arg3[%c0_3, %c0_4] : memref<1x128xf32, #tpu.memory_space<vmem>>, vector<1x128xf32>
    %4 = vector.broadcast %3 : vector<1x128xf32> to vector<8x128xf32>
    %5 = arith.addf %2, %4 : vector<8x128xf32>
    %cst_5 = arith.constant 5.000000e-01 : f32
    %6 = vector.broadcast %cst_5 : f32 to vector<8x128xf32>
    %7 = arith.mulf %6, %5 : vector<8x128xf32>
    %8 = math.tanh %7 : vector<8x128xf32>
    %cst_6 = arith.constant 1.000000e+00 : f32
    %9 = vector.broadcast %cst_6 : f32 to vector<8x128xf32>
    %10 = arith.addf %8, %9 : vector<8x128xf32>
    %cst_7 = arith.constant 5.000000e-01 : f32
    %11 = vector.broadcast %cst_7 : f32 to vector<8x128xf32>
    %12 = arith.mulf %11, %10 : vector<8x128xf32>
    %c0_8 = arith.constant 0 : index
    %c0_9 = arith.constant 0 : index
    %13 = vector.load %arg4[%c0_8, %c0_9] : memref<128x128xf32, #tpu.memory_space<vmem>>, vector<128x128xf32>
    %cst_10 = arith.constant dense<0.000000e+00> : vector<8x128xf32>
    %14 = tpu.matmul %12, %13, %cst_10 {dimension_numbers = #tpu.dot_dimension_numbers<[1], [0], [0], [1], [0, 0, 1, 1], [], []>} : vector<8x128xf32>, vector<128x128xf32>, vector<8x128xf32> -> vector<8x128xf32>
    %c0_11 = arith.constant 0 : index
    %c0_12 = arith.constant 0 : index
    %15 = vector.load %arg5[%c0_11, %c0_12] : memref<1x128xf32, #tpu.memory_space<vmem>>, vector<1x128xf32>
    %16 = vector.broadcast %15 : vector<1x128xf32> to vector<8x128xf32>
    %17 = arith.addf %14, %16 : vector<8x128xf32>
    %cst_13 = arith.constant 5.000000e-01 : f32
    %18 = vector.broadcast %cst_13 : f32 to vector<8x128xf32>
    %19 = arith.mulf %18, %17 : vector<8x128xf32>
    %20 = math.tanh %19 : vector<8x128xf32>
    %cst_14 = arith.constant 1.000000e+00 : f32
    %21 = vector.broadcast %cst_14 : f32 to vector<8x128xf32>
    %22 = arith.addf %20, %21 : vector<8x128xf32>
    %cst_15 = arith.constant 5.000000e-01 : f32
    %23 = vector.broadcast %cst_15 : f32 to vector<8x128xf32>
    %24 = arith.mulf %23, %22 : vector<8x128xf32>
    %c0_16 = arith.constant 0 : index
    %c0_17 = arith.constant 0 : index
    %25 = vector.load %arg6[%c0_16, %c0_17] : memref<128x128xf32, #tpu.memory_space<vmem>>, vector<128x128xf32>
    %cst_18 = arith.constant dense<0.000000e+00> : vector<8x128xf32>
    %26 = tpu.matmul %24, %25, %cst_18 {dimension_numbers = #tpu.dot_dimension_numbers<[1], [0], [0], [1], [0, 0, 1, 1], [], []>} : vector<8x128xf32>, vector<128x128xf32>, vector<8x128xf32> -> vector<8x128xf32>
    %c0_19 = arith.constant 0 : index
    %c0_20 = arith.constant 0 : index
    %27 = vector.load %arg7[%c0_19, %c0_20] : memref<1x128xf32, #tpu.memory_space<vmem>>, vector<1x128xf32>
    %28 = vector.broadcast %27 : vector<1x128xf32> to vector<8x128xf32>
    %29 = arith.addf %26, %28 : vector<8x128xf32>
    %cst_21 = arith.constant 5.000000e-01 : f32
    %30 = vector.broadcast %cst_21 : f32 to vector<8x128xf32>
    %31 = arith.mulf %30, %29 : vector<8x128xf32>
    %32 = math.tanh %31 : vector<8x128xf32>
    %cst_22 = arith.constant 1.000000e+00 : f32
    %33 = vector.broadcast %cst_22 : f32 to vector<8x128xf32>
    %34 = arith.addf %32, %33 : vector<8x128xf32>
    %cst_23 = arith.constant 5.000000e-01 : f32
    %35 = vector.broadcast %cst_23 : f32 to vector<8x128xf32>
    %36 = arith.mulf %35, %34 : vector<8x128xf32>
    %c0_24 = arith.constant 0 : index
    %c0_25 = arith.constant 0 : index
    %37 = vector.load %arg8[%c0_24, %c0_25] : memref<128x128xf32, #tpu.memory_space<vmem>>, vector<128x128xf32>
    %cst_26 = arith.constant dense<0.000000e+00> : vector<8x128xf32>
    %38 = tpu.matmul %36, %37, %cst_26 {dimension_numbers = #tpu.dot_dimension_numbers<[1], [0], [0], [1], [0, 0, 1, 1], [], []>} : vector<8x128xf32>, vector<128x128xf32>, vector<8x128xf32> -> vector<8x128xf32>
    %c0_27 = arith.constant 0 : index
    %c0_28 = arith.constant 0 : index
    %39 = vector.load %arg9[%c0_27, %c0_28] : memref<1x128xf32, #tpu.memory_space<vmem>>, vector<1x128xf32>
    %40 = vector.broadcast %39 : vector<1x128xf32> to vector<8x128xf32>
    %41 = arith.addf %38, %40 : vector<8x128xf32>
    %42 = vector.extract_strided_slice %41 {offsets = [0, 0], sizes = [8, 3], strides = [1, 1]} : vector<8x128xf32> to vector<8x3xf32>
    %c0_29 = arith.constant 0 : index
    %c0_30 = arith.constant 0 : index
    %43 = vector.load %arg10[%c0_29, %c0_30] : memref<8x3xf32, #tpu.memory_space<vmem>>, vector<8x3xf32>
    tpu.vector_store %arg10[%c0_29, %c0_30], %42 {strides = array<i32>} : memref<8x3xf32, #tpu.memory_space<vmem>>, vector<8x3xf32>,
    return
  }
  func.func @transform_0(%arg0: i32) -> (i32, i32) {
    %c0_i32 = arith.constant 0 : i32
    %c0_i32_0 = arith.constant 0 : i32
    return %arg0, %c0_i32 : i32, i32
  }
  func.func @transform_1(%arg0: i32) -> (i32, i32) {
    %c0_i32 = arith.constant 0 : i32
    %c0_i32_0 = arith.constant 0 : i32
    %c0_i32_1 = arith.constant 0 : i32
    return %c0_i32, %c0_i32_0 : i32, i32
  }
  func.func @transform_2(%arg0: i32) -> (i32, i32) {
    %c0_i32 = arith.constant 0 : i32
    %c0_i32_0 = arith.constant 0 : i32
    %c0_i32_1 = arith.constant 0 : i32
    return %c0_i32, %c0_i32_0 : i32, i32
  }
  func.func @transform_3(%arg0: i32) -> (i32, i32) {
    %c0_i32 = arith.constant 0 : i32
    %c0_i32_0 = arith.constant 0 : i32
    %c0_i32_1 = arith.constant 0 : i32
    return %c0_i32, %c0_i32_0 : i32, i32
  }
  func.func @transform_4(%arg0: i32) -> (i32, i32) {
    %c0_i32 = arith.constant 0 : i32
    %c0_i32_0 = arith.constant 0 : i32
    %c0_i32_1 = arith.constant 0 : i32
    return %c0_i32, %c0_i32_0 : i32, i32
  }
  func.func @transform_5(%arg0: i32) -> (i32, i32) {
    %c0_i32 = arith.constant 0 : i32
    %c0_i32_0 = arith.constant 0 : i32
    %c0_i32_1 = arith.constant 0 : i32
    return %c0_i32, %c0_i32_0 : i32, i32
  }
  func.func @transform_6(%arg0: i32) -> (i32, i32) {
    %c0_i32 = arith.constant 0 : i32
    %c0_i32_0 = arith.constant 0 : i32
    %c0_i32_1 = arith.constant 0 : i32
    return %c0_i32, %c0_i32_0 : i32, i32
  }
  func.func @transform_7(%arg0: i32) -> (i32, i32) {
    %c0_i32 = arith.constant 0 : i32
    %c0_i32_0 = arith.constant 0 : i32
    %c0_i32_1 = arith.constant 0 : i32
    return %c0_i32, %c0_i32_0 : i32, i32
  }
  func.func @transform_8(%arg0: i32) -> (i32, i32) {
    %c0_i32 = arith.constant 0 : i32
    %c0_i32_0 = arith.constant 0 : i32
    %c0_i32_1 = arith.constant 0 : i32
    return %c0_i32, %c0_i32_0 : i32, i32
  }
  func.func @transform_9(%arg0: i32) -> (i32, i32) {
    %c0_i32 = arith.constant 0 : i32
    %c0_i32_0 = arith.constant 0 : i32
    return %arg0, %c0_i32 : i32, i32
  }
}

</mosaic_0001>

<llo_original>
// kernel: tpu_custom_call.1
$region0: #{tpu_custom_call.1}
  #allocation0 [shape = 'u32[]', space=smem, size = 0x4, offset = 0x4, fixed_abs, tag = 'smem constant byte address 0x4 - core index']
  #allocation1 [shape = 'u32[72,128]{1,0:T(1,128)}', space=vmem, size = 0x9000, scoped, tag = 'internal scratch']
  %s0 = inlined_call_operand.hbm [shape: f32[8,16], index: 0, kind: input, shape index: {}]
  %s1 = inlined_call_operand.hbm [shape: f32[16,128], index: 1, kind: input, shape index: {}]
  %s2 = inlined_call_operand.vmem [shape: f32[1,128], index: 2, kind: input, shape index: {}]
  %s3 = inlined_call_operand.hbm [shape: f32[128,128], index: 3, kind: input, shape index: {}]
  %s4 = inlined_call_operand.vmem [shape: f32[1,128], index: 4, kind: input, shape index: {}]
  %s5 = inlined_call_operand.hbm [shape: f32[128,128], index: 5, kind: input, shape index: {}]
  %s6 = inlined_call_operand.vmem [shape: f32[1,128], index: 6, kind: input, shape index: {}]
  %s7 = inlined_call_operand.hbm [shape: f32[128,128], index: 7, kind: input, shape index: {}]
  %s8 = inlined_call_operand.vmem [shape: f32[1,128], index: 8, kind: input, shape index: {}]
  %s9 = inlined_call_operand.vmem [shape: f32[8,3], index: 9, kind: output, shape index: {}]
  %s10 = sld [smem:[#allocation0]]
  $region66: #{tpu_custom_call.1} parent=0
    _
  %s12 = ssub.s32 1, %s10
  %s13 = scalar_select 0, %s12, %s10
  $region1: #{tpu_custom_call.1} parent=0
    #allocation2 [shape = 'u8[4096]{0}', space=vmem, size = 0x1000, scoped, tag = 'input window, operand 0, single buffered']
    #allocation3 [shape = 's32[1]{0}', space=sflag, size = 0x4, scoped, tag = 'scoped memory for tpu_custom_call.1']
    #allocation4 [shape = 'u8[8192]{0}', space=vmem, size = 0x2000, scoped, tag = 'input window, operand 1, single buffered']
    #allocation5 [shape = 's32[1]{0}', space=sflag, size = 0x4, scoped, tag = 'scoped memory for tpu_custom_call.1']
    #allocation6 [shape = 'u8[65536]{0}', space=vmem, size = 0x10000, scoped, tag = 'input window, operand 3, single buffered']
    #allocation7 [shape = 'u8[65536]{0}', space=vmem, size = 0x10000, scoped, tag = 'input window, operand 5, single buffered']
    #allocation8 [shape = 's32[1]{0}', space=sflag, size = 0x4, scoped, tag = 'scoped memory for tpu_custom_call.1']
    #allocation9 [shape = 'u8[65536]{0}', space=vmem, size = 0x10000, scoped, tag = 'input window, operand 7, single buffered']
    %14 = vsyncpa [#allocation3], 0
    %15 = vsyncpa [#allocation5], 0
    %16 = vsyncpa [#allocation8], 0
    // Predicated region
    $region2: #{tpu_custom_call.1} parent=1 // pred_check
      _
    $region3: #{tpu_custom_call.1} parent=1 // pred_check_branch
      %18 = sbr.rel (0) target = $region5
    $region4: #{tpu_custom_call.1} parent=1 // pred_region
      %20 = vsyncadd [#allocation3], 0
      %s22 = sshll.u32 %s0, 4
      %s23 = int_to_ptr.hbm [resolvable:$true] %s22
      %s24 = sshll.u32 [#allocation2], 4
      %s25 = int_to_ptr.vmem [resolvable:$true] %s24
      %27 = dma.hbm_to_vmem [thread:$0]  %s23, 128, %s25, [#allocation3]
    $region5: #{tpu_custom_call.1} parent=1 // pred_fallthru
      _
    // Predicated region
    $region6: #{tpu_custom_call.1} parent=1 // pred_check
      _
    $region7: #{tpu_custom_call.1} parent=1 // pred_check_branch
      %29 = sbr.rel (0) target = $region9
    $region8: #{tpu_custom_call.1} parent=1 // pred_region
      %31 = vsyncadd [#allocation5], 0
      %s32 = sshll.u32 %s1, 4
      %s33 = int_to_ptr.hbm [resolvable:$true] %s32
      %s34 = sshll.u32 [#allocation4], 4
      %s35 = int_to_ptr.vmem [resolvable:$true] %s34
      %40 = dma.hbm_to_vmem [thread:$0]  %s33, 256, %s35, [#allocation5], 128, 128, 8
    $region9: #{tpu_custom_call.1} parent=1 // pred_fallthru
      _
    // Predicated region
    $region10: #{tpu_custom_call.1} parent=1 // pred_check
      _
    $region11: #{tpu_custom_call.1} parent=1 // pred_check_branch
      %42 = sbr.rel (0) target = $region13
    $region12: #{tpu_custom_call.1} parent=1 // pred_region
      _
    $region13: #{tpu_custom_call.1} parent=1 // pred_fallthru
      _
    // Predicated region
    $region14: #{tpu_custom_call.1} parent=1 // pred_check
      _
    $region15: #{tpu_custom_call.1} parent=1 // pred_check_branch
      %44 = sbr.rel (0) target = $region17
    $region16: #{tpu_custom_call.1} parent=1 // pred_region
      %46 = vsyncadd [#allocation5], 0
      %s47 = sshll.u32 %s3, 4
      %s48 = int_to_ptr.hbm [resolvable:$true] %s47
      %s49 = sshll.u32 [#allocation6], 4
      %s50 = int_to_ptr.vmem [resolvable:$true] %s49
      %55 = dma.hbm_to_vmem [thread:$0]  %s48, 2048, %s50, [#allocation5], 128, 128, 8
    $region17: #{tpu_custom_call.1} parent=1 // pred_fallthru
      _
    // Predicated region
    $region18: #{tpu_custom_call.1} parent=1 // pred_check
      _
    $region19: #{tpu_custom_call.1} parent=1 // pred_check_branch
      %57 = sbr.rel (0) target = $region21
    $region20: #{tpu_custom_call.1} parent=1 // pred_region
      _
    $region21: #{tpu_custom_call.1} parent=1 // pred_fallthru
      _
    // Predicated region
    $region22: #{tpu_custom_call.1} parent=1 // pred_check
      _
    $region23: #{tpu_custom_call.1} parent=1 // pred_check_branch
      %59 = sbr.rel (0) target = $region25
    $region24: #{tpu_custom_call.1} parent=1 // pred_region
      %61 = vsyncadd [#allocation8], 0
      %s62 = sshll.u32 %s5, 4
      %s63 = int_to_ptr.hbm [resolvable:$true] %s62
      %s64 = sshll.u32 [#allocation7], 4
      %s65 = int_to_ptr.vmem [resolvable:$true] %s64
      %70 = dma.hbm_to_vmem [thread:$0]  %s63, 2048, %s65, [#allocation8], 128, 128, 8
    $region25: #{tpu_custom_call.1} parent=1 // pred_fallthru
      _
    // Predicated region
    $region26: #{tpu_custom_call.1} parent=1 // pred_check
      _
    $region27: #{tpu_custom_call.1} parent=1 // pred_check_branch
      %72 = sbr.rel (0) target = $region29
    $region28: #{tpu_custom_call.1} parent=1 // pred_region
      _
    $region29: #{tpu_custom_call.1} parent=1 // pred_fallthru
      _
    // Predicated region
    $region30: #{tpu_custom_call.1} parent=1 // pred_check
      _
    $region31: #{tpu_custom_call.1} parent=1 // pred_check_branch
      %74 = sbr.rel (0) target = $region33
    $region32: #{tpu_custom_call.1} parent=1 // pred_region
      %76 = vsyncadd [#allocation8], 0
      %s77 = sshll.u32 %s7, 4
      %s78 = int_to_ptr.hbm [resolvable:$true] %s77
      %s79 = sshll.u32 [#allocation9], 4
      %s80 = int_to_ptr.vmem [resolvable:$true] %s79
      %85 = dma.hbm_to_vmem [thread:$0]  %s78, 2048, %s80, [#allocation8], 128, 128, 8
    $region33: #{tpu_custom_call.1} parent=1 // pred_fallthru
      _
    // Predicated region
    $region34: #{tpu_custom_call.1} parent=1 // pred_check
      _
    $region35: #{tpu_custom_call.1} parent=1 // pred_check_branch
      %87 = sbr.rel (0) target = $region37
    $region36: #{tpu_custom_call.1} parent=1 // pred_region
      _
    $region37: #{tpu_custom_call.1} parent=1 // pred_fallthru
      _
    // Predicated region
    $region38: #{tpu_custom_call.1} parent=1 // pred_check
      _
    $region39: #{tpu_custom_call.1} parent=1 // pred_check_branch
      %89 = sbr.rel (0) target = $region41
    $region40: #{tpu_custom_call.1} parent=1 // pred_region
      %91 = dma.done [#allocation3], 128
    $region41: #{tpu_custom_call.1} parent=1 // pred_fallthru
      _
    // Predicated region
    $region42: #{tpu_custom_call.1} parent=1 // pred_check
      _
    $region43: #{tpu_custom_call.1} parent=1 // pred_check_branch
      %93 = sbr.rel (0) target = $region45
    $region44: #{tpu_custom_call.1} parent=1 // pred_region
      %95 = dma.done [#allocation5], 256
    $region45: #{tpu_custom_call.1} parent=1 // pred_fallthru
      _
    // Predicated region
    $region46: #{tpu_custom_call.1} parent=1 // pred_check
      _
    $region47: #{tpu_custom_call.1} parent=1 // pred_check_branch
      %97 = sbr.rel (0) target = $region49
    $region48: #{tpu_custom_call.1} parent=1 // pred_region
      %99 = dma.done [#allocation5], 2048
    $region49: #{tpu_custom_call.1} parent=1 // pred_fallthru
      _
    // Predicated region
    $region50: #{tpu_custom_call.1} parent=1 // pred_check
      _
    $region51: #{tpu_custom_call.1} parent=1 // pred_check_branch
      %101 = sbr.rel (0) target = $region53
    $region52: #{tpu_custom_call.1} parent=1 // pred_region
      %103 = dma.done [#allocation8], 2048
    $region53: #{tpu_custom_call.1} parent=1 // pred_fallthru
      _
    // Predicated region
    $region54: #{tpu_custom_call.1} parent=1 // pred_check
      _
    $region55: #{tpu_custom_call.1} parent=1 // pred_check_branch
      %105 = sbr.rel (0) target = $region57
    $region56: #{tpu_custom_call.1} parent=1 // pred_region
      %107 = dma.done [#allocation8], 2048
    $region57: #{tpu_custom_call.1} parent=1 // pred_fallthru
      _
    %v108 = vld [vmem:[#allocation2] sm:$0xff]
    %v109 = vld [vmem:[#allocation4] sm:$0xff]
    %v110 = vld [vmem:[#allocation4 + $0x8] sm:$0xff]
    %v111 = vld [vmem:[%s2] sm:$0x1]
    %v113 = vperm.slane %v111, 0
    %vm115 = vcmask 130048
    %v117 = vsel %vm115, %v108, 0
    %119 = vmatpush.msra.mxu0 0.0
    %120 = vmatpush.msra.mxu0 0.0
    %121 = vmatpush.msra.mxu0 0.0
    %122 = vmatpush.msra.mxu0 0.0
    %123 = vmatpush.msra.mxu0 0.0
    %124 = vmatpush.msra.mxu0 0.0
    %125 = vmatpush.msra.mxu0 0.0
    %126 = vmatpush.msra.mxu0 0.0
    %127 = vmatpush.msra.mxu0 0.0
    %128 = vmatpush.msra.mxu0 0.0
    %129 = vmatpush.msra.mxu0 0.0
    %130 = vmatpush.msra.mxu0 0.0
    %131 = vmatpush.msra.mxu0 0.0
    %132 = vmatpush.msra.mxu0 0.0
    %133 = vmatpush.msra.mxu0 %v110
    %134 = vmatpush.msra.mxu0 %v109
    %135 = vmatmul.f32.gmra.mxu0 %v117
    %v136 = vpop.f32.mrf.mxu0
    %v137 = vadd.f32 %v113, %v136
    %138 = vdwg.mxu0
    %v139 = vmul.f32 %v137, 0.5
    %v140 = vtanh.pop %v139
    %v141 = vadd.f32 %v140, 1.0
    %v142 = vmul.f32 %v141, 0.5
    %v143 = vld [vmem:[#allocation6] sm:$0xff]
    %v144 = vld [vmem:[#allocation6 + $0x8] sm:$0xff]
    %v145 = vld [vmem:[#allocation6 + $0x10] sm:$0xff]
    %v146 = vld [vmem:[#allocation6 + $0x18] sm:$0xff]
    %v147 = vld [vmem:[#allocation6 + $0x20] sm:$0xff]
    %v148 = vld [vmem:[#allocation6 + $0x28] sm:$0xff]
    %v149 = vld [vmem:[#allocation6 + $0x30] sm:$0xff]
    %v150 = vld [vmem:[#allocation6 + $0x38] sm:$0xff]
    %v151 = vld [vmem:[#allocation6 + $0x40] sm:$0xff]
    %v152 = vld [vmem:[#allocation6 + $0x48] sm:$0xff]
    %v153 = vld [vmem:[#allocation6 + $0x50] sm:$0xff]
    %v154 = vld [vmem:[#allocation6 + $0x58] sm:$0xff]
    %v155 = vld [vmem:[#allocation6 + $0x60] sm:$0xff]
    %v156 = vld [vmem:[#allocation6 + $0x68] sm:$0xff]
    %v157 = vld [vmem:[#allocation6 + $0x70] sm:$0xff]
    %v158 = vld [vmem:[#allocation6 + $0x78] sm:$0xff]
    %v159 = vld [vmem:[%s4] sm:$0x1]
    %v161 = vperm.slane %v159, 0
    %163 = vmatpush.msra.mxu0 %v158
    %164 = vmatpush.msra.mxu0 %v157
    %165 = vmatpush.msra.mxu0 %v156
    %166 = vmatpush.msra.mxu0 %v155
    %167 = vmatpush.msra.mxu0 %v154
    %168 = vmatpush.msra.mxu0 %v153
    %169 = vmatpush.msra.mxu0 %v152
    %170 = vmatpush.msra.mxu0 %v151
    %171 = vmatpush.msra.mxu0 %v150
    %172 = vmatpush.msra.mxu0 %v149
    %173 = vmatpush.msra.mxu0 %v148
    %174 = vmatpush.msra.mxu0 %v147
    %175 = vmatpush.msra.mxu0 %v146
    %176 = vmatpush.msra.mxu0 %v145
    %177 = vmatpush.msra.mxu0 %v144
    %178 = vmatpush.msra.mxu0 %v143
    %179 = vmatmul.f32.gmra.mxu0 %v142
    %v180 = vpop.f32.mrf.mxu0
    %v181 = vadd.f32 %v161, %v180
    %182 = vdwg.mxu0
    %v183 = vmul.f32 %v181, 0.5
    %v184 = vtanh.pop %v183
    %v185 = vadd.f32 %v184, 1.0
    %v186 = vmul.f32 %v185, 0.5
    %v187 = vld [vmem:[#allocation7] sm:$0xff]
    %v188 = vld [vmem:[#allocation7 + $0x8] sm:$0xff]
    %v189 = vld [vmem:[#allocation7 + $0x10] sm:$0xff]
    %v190 = vld [vmem:[#allocation7 + $0x18] sm:$0xff]
    %v191 = vld [vmem:[#allocation7 + $0x20] sm:$0xff]
    %v192 = vld [vmem:[#allocation7 + $0x28] sm:$0xff]
    %v193 = vld [vmem:[#allocation7 + $0x30] sm:$0xff]
    %v194 = vld [vmem:[#allocation7 + $0x38] sm:$0xff]
    %v195 = vld [vmem:[#allocation7 + $0x40] sm:$0xff]
    %v196 = vld [vmem:[#allocation7 + $0x48] sm:$0xff]
    %v197 = vld [vmem:[#allocation7 + $0x50] sm:$0xff]
    %v198 = vld [vmem:[#allocation7 + $0x58] sm:$0xff]
    %v199 = vld [vmem:[#allocation7 + $0x60] sm:$0xff]
    %v200 = vld [vmem:[#allocation7 + $0x68] sm:$0xff]
    %v201 = vld [vmem:[#allocation7 + $0x70] sm:$0xff]
    %v202 = vld [vmem:[#allocation7 + $0x78] sm:$0xff]
    %v203 = vld [vmem:[%s6] sm:$0x1]
    %v205 = vperm.slane %v203, 0
    %207 = vmatpush.msra.mxu0 %v202
    %208 = vmatpush.msra.mxu0 %v201
    %209 = vmatpush.msra.mxu0 %v200
    %210 = vmatpush.msra.mxu0 %v199
    %211 = vmatpush.msra.mxu0 %v198
    %212 = vmatpush.msra.mxu0 %v197
    %213 = vmatpush.msra.mxu0 %v196
    %214 = vmatpush.msra.mxu0 %v195
    %215 = vmatpush.msra.mxu0 %v194
    %216 = vmatpush.msra.mxu0 %v193
    %217 = vmatpush.msra.mxu0 %v192
    %218 = vmatpush.msra.mxu0 %v191
    %219 = vmatpush.msra.mxu0 %v190
    %220 = vmatpush.msra.mxu0 %v189
    %221 = vmatpush.msra.mxu0 %v188
    %222 = vmatpush.msra.mxu0 %v187
    %223 = vmatmul.f32.gmra.mxu0 %v186
    %v224 = vpop.f32.mrf.mxu0
    %v225 = vadd.f32 %v205, %v224
    %226 = vdwg.mxu0
    %v227 = vmul.f32 %v225, 0.5
    %v228 = vtanh.pop %v227
    %v229 = vadd.f32 %v228, 1.0
    %v230 = vmul.f32 %v229, 0.5
    %v231 = vld [vmem:[#allocation9] sm:$0xff]
    %v232 = vld [vmem:[#allocation9 + $0x8] sm:$0xff]
    %v233 = vld [vmem:[#allocation9 + $0x10] sm:$0xff]
    %v234 = vld [vmem:[#allocation9 + $0x18] sm:$0xff]
    %v235 = vld [vmem:[#allocation9 + $0x20] sm:$0xff]
    %v236 = vld [vmem:[#allocation9 + $0x28] sm:$0xff]
    %v237 = vld [vmem:[#allocation9 + $0x30] sm:$0xff]
    %v238 = vld [vmem:[#allocation9 + $0x38] sm:$0xff]
    %v239 = vld [vmem:[#allocation9 + $0x40] sm:$0xff]
    %v240 = vld [vmem:[#allocation9 + $0x48] sm:$0xff]
    %v241 = vld [vmem:[#allocation9 + $0x50] sm:$0xff]
    %v242 = vld [vmem:[#allocation9 + $0x58] sm:$0xff]
    %v243 = vld [vmem:[#allocation9 + $0x60] sm:$0xff]
    %v244 = vld [vmem:[#allocation9 + $0x68] sm:$0xff]
    %v245 = vld [vmem:[#allocation9 + $0x70] sm:$0xff]
    %v246 = vld [vmem:[#allocation9 + $0x78] sm:$0xff]
    %v247 = vld [vmem:[%s8] sm:$0x1]
    %v249 = vperm.slane %v247, 0
    %251 = vmatpush.msra.mxu0 %v246
    %252 = vmatpush.msra.mxu0 %v245
    %253 = vmatpush.msra.mxu0 %v244
    %254 = vmatpush.msra.mxu0 %v243
    %255 = vmatpush.msra.mxu0 %v242
    %256 = vmatpush.msra.mxu0 %v241
    %257 = vmatpush.msra.mxu0 %v240
    %258 = vmatpush.msra.mxu0 %v239
    %259 = vmatpush.msra.mxu0 %v238
    %260 = vmatpush.msra.mxu0 %v237
    %261 = vmatpush.msra.mxu0 %v236
    %262 = vmatpush.msra.mxu0 %v235
    %263 = vmatpush.msra.mxu0 %v234
    %264 = vmatpush.msra.mxu0 %v233
    %265 = vmatpush.msra.mxu0 %v232
    %266 = vmatpush.msra.mxu0 %v231
    %267 = vmatmul.f32.gmra.mxu0 %v230
    %v268 = vpop.f32.mrf.mxu0
    %v269 = vadd.f32 %v249, %v268
    %270 = vdwg.mxu0
    %vm271 = vcmask 23552
    %272 = vst.msk [vmem:[%s9] sm:$0xff] %vm271, %v269
    // Predicated region
    $region58: #{tpu_custom_call.1} parent=1 // pred_check
      _
    $region59: #{tpu_custom_call.1} parent=1 // pred_check_branch
      %274 = sbr.rel (0) target = $region61
    $region60: #{tpu_custom_call.1} parent=1 // pred_region
      _
    $region61: #{tpu_custom_call.1} parent=1 // pred_fallthru
      _
    // Predicated region
    $region62: #{tpu_custom_call.1} parent=1 // pred_check
      _
    $region63: #{tpu_custom_call.1} parent=1 // pred_check_branch
      %276 = sbr.rel (0) target = $region65
    $region64: #{tpu_custom_call.1} parent=1 // pred_region
      _
    $region65: #{tpu_custom_call.1} parent=1 // pred_fallthru
      _
    %277 = vsyncpa [#allocation3], 1
    %278 = vsyncpa [#allocation5], 1
    %279 = vsyncpa [#allocation8], 1

</llo_original>
